<compile_context>
chip_gen: v7x
topology: tpu7x:2x2x1
jax: 0.10.0
libtpu: 0.0.40
codegen_flags: <defaults>
</compile_context>

<pallas_src>
import functools

import jax
import jax.numpy as jnp
from jax.experimental import pallas as pl
from jax.experimental.pallas import tpu as pltpu


_SQRT_HALF = 0.7071067811865476      # 1/sqrt(2)
_GELU_TANH_C = 0.7978845608028654    # sqrt(2/pi)


def _gelu(x, approximate):
    if approximate:
        # tanh GELU: the transcendental runs on the EUP slot, keeping the VALU
        # free so the kernel stays purely HBM-bound on v6e/v7x.
        return 0.5 * x * (1.0 + jnp.tanh(_GELU_TANH_C * (x + 0.044715 * x * x * x)))
    # PyTorch nn.GELU() default = exact erf formulation.
    return 0.5 * x * (1.0 + jax.lax.erf(x * _SQRT_HALF))


def _irreversible_block_kernel(x_ref, wf_ref, bf_ref, wg_ref, bg_ref, out_ref,
                               *, d, sub_rows, num_subtiles, approximate_gelu):
    """y1 = x1 + f(x2); y2 = x2 + g(y1) for one (tr, 2*D) row tile."""
    # Weights/biases stay VMEM-resident across the whole grid (constant index
    # maps).  bf16 weights feed the MXU; accumulation is f32.
    wf = wf_ref[...]
    wg = wg_ref[...]
    bf = bf_ref[...]
    bg = bg_ref[...]

    # Independent row sub-tiles: the g-matmul of one sub-tile can overlap the
    # f-GELU (VPU/EUP) of the next; storing each sub-tile's outputs right away
    # bounds the live f32 intermediates in VMEM.
    # TODO(synk): for very large D on v7x (64 MiB VMEM) switch to
    # lax.fori_loop(unroll=True) over >2 sub-tiles to further bound live ranges.
    for s in range(num_subtiles):
        r0 = s * sub_rows
        x1 = x_ref[r0:r0 + sub_rows, :d]
        x2 = x_ref[r0:r0 + sub_rows, d:]
        f_out = jnp.dot(x2.astype(jnp.bfloat16), wf,
                        preferred_element_type=jnp.float32)
        y1 = x1 + _gelu(f_out + bf, approximate_gelu)
        g_out = jnp.dot(y1.astype(jnp.bfloat16), wg,
                        preferred_element_type=jnp.float32)
        y2 = x2 + _gelu(g_out + bg, approximate_gelu)
        out_ref[r0:r0 + sub_rows, :d] = y1.astype(out_ref.dtype)
        out_ref[r0:r0 + sub_rows, d:] = y2.astype(out_ref.dtype)


def _vmem_capacity_bytes():
    try:
        cap = int(getattr(pltpu.get_tpu_info(), "vmem_capacity_bytes", 0))
        if cap > 0:
            return cap
    except Exception:
        pass
    return 64 * 1024 * 1024   # v7x floor -> conservative and safe everywhere


def _pick_row_tile(rows, d, io_bytes, row_tile_cap, vmem_cap):
    f = 2 * d
    # Resident weights/biases (counted double-buffered to stay conservative).
    # TODO(synk): mark weight/bias BlockSpecs pipeline_mode=pl.Buffered(1) to
    # reclaim the unused second buffer at very large D.
    weight_bytes = 2 * (d * d * 2 + d * 4) * 2
    # Double-buffered x + out row tiles, plus per-row headroom for the f32
    # intermediates kept live inside one sub-tile.
    per_row = 2 * f * io_bytes * 2 + 3 * d * 4
    budget = int(vmem_cap * 0.6) - weight_bytes
    tr = max(8, budget // max(per_row, 1))
    tr = min(tr, row_tile_cap, max(rows, 1))
    if rows < 8:
        tr = rows                       # full-extent block satisfies (8,128) rule
    else:
        tr = max(8, (tr // 8) * 8)      # sublane-aligned
    num_subtiles = 2 if (tr >= 16 and tr % 16 == 0) else 1
    return tr, num_subtiles


def irreversible_block(x, wf, bf, wg, bg, *, row_tile=8192, approximate_gelu=True):
    """Forward of IrreversibleBlock with f = g = dense + GELU.

    x: (B, S, 2*D); wf/wg: (D, D); bf/bg: (1, D).
    Activations may be f32 or bf16 (bf16 halves HBM traffic on this
    memory-bound op); weights may be pre-cast to bf16 to skip the per-call cast.
    """
    B, S, F = x.shape
    D = F // 2
    assert F == 2 * D
    assert wf.shape == (D, D) and wg.shape == (D, D)
    assert bf.shape == (1, D) and bg.shape == (1, D)

    rows = B * S
    x2d = x.reshape(rows, F)
    io_bytes = x.dtype.itemsize

    vmem_cap = _vmem_capacity_bytes()
    tr, num_subtiles = _pick_row_tile(rows, D, io_bytes, row_tile, vmem_cap)
    sub_rows = tr // num_subtiles
    grid = (pl.cdiv(rows, tr),)

    # bf16 MXU weights (halves resident weight bytes).  Cast only if needed so
    # params stored in bf16 avoid an extra per-call HBM round trip.
    wf_b = wf if wf.dtype == jnp.bfloat16 else wf.astype(jnp.bfloat16)
    wg_b = wg if wg.dtype == jnp.bfloat16 else wg.astype(jnp.bfloat16)
    bf32 = bf.astype(jnp.float32)
    bg32 = bg.astype(jnp.float32)

    kernel = functools.partial(
        _irreversible_block_kernel, d=D, sub_rows=sub_rows,
        num_subtiles=num_subtiles, approximate_gelu=approximate_gelu)

    # Scoped-VMEM limit from the actual footprint, capped at physical VMEM.
    tile_io = 2 * tr * F * io_bytes * 2                     # in + out, double-buffered
    weights_vmem = 2 * (D * D * 2 + D * 4) * 2
    interm = sub_rows * D * 4 * 8                            # generous f32 headroom
    vmem_limit = min(vmem_cap,
                     max(32 * 1024 * 1024,
                         tile_io + weights_vmem + interm + (4 << 20)))

    cost = pl.CostEstimate(
        flops=4 * rows * D * D,                              # two rows x D x D matmuls
        transcendentals=2 * rows * D,                        # two GELUs per row
        bytes_accessed=2 * rows * F * io_bytes + 2 * D * D * 2 + 2 * D * 4,
    )

    out = pl.pallas_call(
        kernel,
        out_shape=jax.ShapeDtypeStruct((rows, F), x.dtype),
        grid_spec=pltpu.PrefetchScalarGridSpec(
            num_scalar_prefetch=0,
            grid=grid,
            in_specs=[
                pl.BlockSpec((tr, F), lambda i: (i, 0)),     # x row tile
                pl.BlockSpec((D, D), lambda i: (0, 0)),      # Wf (VMEM resident)
                pl.BlockSpec((1, D), lambda i: (0, 0)),      # bf (VMEM resident)
                pl.BlockSpec((D, D), lambda i: (0, 0)),      # Wg (VMEM resident)
                pl.BlockSpec((1, D), lambda i: (0, 0)),      # bg (VMEM resident)
            ],
            out_specs=pl.BlockSpec((tr, F), lambda i: (i, 0)),
        ),
        compiler_params=pltpu.CompilerParams(
            # Row tiles are fully independent -> megacore sharding.
            # TODO(synk): use pltpu.CORE_PARALLEL on v7x if plain "parallel"
            # does not actually shard the row grid across both TensorCores.
            dimension_semantics=("parallel",),
            vmem_limit_bytes=int(vmem_limit),
        ),
        cost_estimate=cost,
    )(x2d, wf_b, bf32, wg_b, bg32)

    # TODO(synk): when several IrreversibleBlocks run back-to-back, fuse them
    # into one pallas_call keeping the (tr, 2D) slab in VMEM across layers.
    return out.reshape(B, S, F)


def reference(x, wf, bf, wg, bg, *, approximate_gelu=True):
    """Pure-JAX f32 reference matching the PyTorch module semantics."""
    D = x.shape[-1] // 2
    x1, x2 = x[..., :D], x[..., D:]
    y1 = x1 + _gelu(jnp.einsum("bsd,de->bse", x2, wf) + bf[0], approximate_gelu)
    y2 = x2 + _gelu(jnp.einsum("bsd,de->bse", y1, wg) + bg[0], approximate_gelu)
    return jnp.concatenate([y1, y2], axis=-1)


if __name__ == "__main__":
    key = jax.random.PRNGKey(0)
    kx, kwf, kbf, kwg, kbg = jax.random.split(key, 5)

    D = 128
    BATCH, SEQ = 2, 8

    x = jax.random.normal(kx, (BATCH, SEQ, 2 * D), dtype=jnp.float32)
    wf = jax.random.normal(kwf, (D, D), dtype=jnp.float32) * 0.05
    bf = jax.random.normal(kbf, (1, D), dtype=jnp.float32) * 0.05
    wg = jax.random.normal(kwg, (D, D), dtype=jnp.float32) * 0.05
    bg = jax.random.normal(kbg, (1, D), dtype=jnp.float32) * 0.05

    out = irreversible_block(x, wf, bf, wg, bg)
    out = jax.block_until_ready(out)

    ref = reference(x, wf, bf, wg, bg)
    assert out.shape == (BATCH, SEQ, 2 * D)
    # bf16 MXU inputs (f32 accumulation) vs the pure-f32 reference: errors
    # observed are ~1e-3 at these scales; tolerance loosened accordingly.
    assert jnp.allclose(out, ref, atol=3e-2, rtol=3e-2), "mismatch vs reference"

    print("KERNEL_OK")
</pallas_src>

<mosaic_0001>
module attributes {stable_mosaic.version = 11 : i64} {
  func.func @_irreversible_block_kernel(%arg0: i32, %arg1: memref<16x256xf32, #tpu.memory_space<vmem>>, %arg2: memref<128x128xbf16, #tpu.memory_space<vmem>>, %arg3: memref<1x128xf32, #tpu.memory_space<vmem>>, %arg4: memref<128x128xbf16, #tpu.memory_space<vmem>>, %arg5: memref<1x128xf32, #tpu.memory_space<vmem>>, %arg6: memref<16x256xf32, #tpu.memory_space<vmem>>) attributes {dimension_semantics = [#tpu.dimension_semantics<parallel>], iteration_bounds = array<i64: 1>, scalar_prefetch = 0 : i64, scratch_operands = 0 : i64, tpu.core_type = #tpu.core_type<tc>, window_params = [{transform_indices = @transform_0, window_bounds = array<i64: 16, 256>}, {pipeline_mode = #tpu.pipeline_mode<synchronous>, transform_indices = @transform_1, window_bounds = array<i64: 128, 128>}, {pipeline_mode = #tpu.pipeline_mode<synchronous>, transform_indices = @transform_2, window_bounds = array<i64: 1, 128>}, {pipeline_mode = #tpu.pipeline_mode<synchronous>, transform_indices = @transform_3, window_bounds = array<i64: 128, 128>}, {pipeline_mode = #tpu.pipeline_mode<synchronous>, transform_indices = @transform_4, window_bounds = array<i64: 1, 128>}, {transform_indices = @transform_5, window_bounds = array<i64: 16, 256>}]} {
    %c0 = arith.constant 0 : index
    %c0_0 = arith.constant 0 : index
    %0 = vector.load %arg2[%c0, %c0_0] : memref<128x128xbf16, #tpu.memory_space<vmem>>, vector<128x128xbf16>
    %c0_1 = arith.constant 0 : index
    %c0_2 = arith.constant 0 : index
    %1 = vector.load %arg4[%c0_1, %c0_2] : memref<128x128xbf16, #tpu.memory_space<vmem>>, vector<128x128xbf16>
    %c0_3 = arith.constant 0 : index
    %c0_4 = arith.constant 0 : index
    %2 = vector.load %arg3[%c0_3, %c0_4] : memref<1x128xf32, #tpu.memory_space<vmem>>, vector<1x128xf32>
    %c0_5 = arith.constant 0 : index
    %c0_6 = arith.constant 0 : index
    %3 = vector.load %arg5[%c0_5, %c0_6] : memref<1x128xf32, #tpu.memory_space<vmem>>, vector<1x128xf32>
    %c0_7 = arith.constant 0 : index
    %c0_8 = arith.constant 0 : index
    %4 = vector.load %arg1[%c0_7, %c0_8] : memref<16x256xf32, #tpu.memory_space<vmem>>, vector<8x128xf32>
    %c0_9 = arith.constant 0 : index
    %c128 = arith.constant 128 : index
    %5 = vector.load %arg1[%c0_9, %c128] : memref<16x256xf32, #tpu.memory_space<vmem>>, vector<8x128xf32>
    %6 = arith.truncf %5 : vector<8x128xf32> to vector<8x128xbf16>
    %cst = arith.constant dense<0.000000e+00> : vector<8x128xf32>
    %7 = tpu.matmul %6, %0, %cst {dimension_numbers = #tpu.dot_dimension_numbers<[1], [0], [0], [1], [0, 0, 1, 1], [], []>} : vector<8x128xbf16>, vector<128x128xbf16>, vector<8x128xf32> -> vector<8x128xf32>
    %8 = vector.broadcast %2 : vector<1x128xf32> to vector<8x128xf32>
    %9 = arith.addf %7, %8 : vector<8x128xf32>
    %cst_10 = arith.constant 5.000000e-01 : f32
    %10 = vector.broadcast %cst_10 : f32 to vector<8x128xf32>
    %11 = arith.mulf %10, %9 : vector<8x128xf32>
    %cst_11 = arith.constant 4.471500e-02 : f32
    %12 = vector.broadcast %cst_11 : f32 to vector<8x128xf32>
    %13 = arith.mulf %12, %9 : vector<8x128xf32>
    %14 = arith.mulf %13, %9 : vector<8x128xf32>
    %15 = arith.mulf %14, %9 : vector<8x128xf32>
    %16 = arith.addf %9, %15 : vector<8x128xf32>
    %cst_12 = arith.constant 0.797884583 : f32
    %17 = vector.broadcast %cst_12 : f32 to vector<8x128xf32>
    %18 = arith.mulf %17, %16 : vector<8x128xf32>
    %19 = math.tanh %18 : vector<8x128xf32>
    %cst_13 = arith.constant 1.000000e+00 : f32
    %20 = vector.broadcast %cst_13 : f32 to vector<8x128xf32>
    %21 = arith.addf %20, %19 : vector<8x128xf32>
    %22 = arith.mulf %11, %21 : vector<8x128xf32>
    %23 = arith.addf %4, %22 : vector<8x128xf32>
    %24 = arith.truncf %23 : vector<8x128xf32> to vector<8x128xbf16>
    %cst_14 = arith.constant dense<0.000000e+00> : vector<8x128xf32>
    %25 = tpu.matmul %24, %1, %cst_14 {dimension_numbers = #tpu.dot_dimension_numbers<[1], [0], [0], [1], [0, 0, 1, 1], [], []>} : vector<8x128xbf16>, vector<128x128xbf16>, vector<8x128xf32> -> vector<8x128xf32>
    %26 = vector.broadcast %3 : vector<1x128xf32> to vector<8x128xf32>
    %27 = arith.addf %25, %26 : vector<8x128xf32>
    %cst_15 = arith.constant 5.000000e-01 : f32
    %28 = vector.broadcast %cst_15 : f32 to vector<8x128xf32>
    %29 = arith.mulf %28, %27 : vector<8x128xf32>
    %cst_16 = arith.constant 4.471500e-02 : f32
    %30 = vector.broadcast %cst_16 : f32 to vector<8x128xf32>
    %31 = arith.mulf %30, %27 : vector<8x128xf32>
    %32 = arith.mulf %31, %27 : vector<8x128xf32>
    %33 = arith.mulf %32, %27 : vector<8x128xf32>
    %34 = arith.addf %27, %33 : vector<8x128xf32>
    %cst_17 = arith.constant 0.797884583 : f32
    %35 = vector.broadcast %cst_17 : f32 to vector<8x128xf32>
    %36 = arith.mulf %35, %34 : vector<8x128xf32>
    %37 = math.tanh %36 : vector<8x128xf32>
    %cst_18 = arith.constant 1.000000e+00 : f32
    %38 = vector.broadcast %cst_18 : f32 to vector<8x128xf32>
    %39 = arith.addf %38, %37 : vector<8x128xf32>
    %40 = arith.mulf %29, %39 : vector<8x128xf32>
    %41 = arith.addf %5, %40 : vector<8x128xf32>
    %c0_19 = arith.constant 0 : index
    %c0_20 = arith.constant 0 : index
    %42 = vector.load %arg6[%c0_19, %c0_20] : memref<16x256xf32, #tpu.memory_space<vmem>>, vector<8x128xf32>
    tpu.vector_store %arg6[%c0_19, %c0_20], %23 {strides = array<i32>} : memref<16x256xf32, #tpu.memory_space<vmem>>, vector<8x128xf32>,
    %c0_21 = arith.constant 0 : index
    %c128_22 = arith.constant 128 : index
    %43 = vector.load %arg6[%c0_21, %c128_22] : memref<16x256xf32, #tpu.memory_space<vmem>>, vector<8x128xf32>
    tpu.vector_store %arg6[%c0_21, %c128_22], %41 {strides = array<i32>} : memref<16x256xf32, #tpu.memory_space<vmem>>, vector<8x128xf32>,
    %c8 = arith.constant 8 : index
    %c0_23 = arith.constant 0 : index
    %44 = vector.load %arg1[%c8, %c0_23] : memref<16x256xf32, #tpu.memory_space<vmem>>, vector<8x128xf32>
    %c8_24 = arith.constant 8 : index
    %c128_25 = arith.constant 128 : index
    %45 = vector.load %arg1[%c8_24, %c128_25] : memref<16x256xf32, #tpu.memory_space<vmem>>, vector<8x128xf32>
    %46 = arith.truncf %45 : vector<8x128xf32> to vector<8x128xbf16>
    %cst_26 = arith.constant dense<0.000000e+00> : vector<8x128xf32>
    %47 = tpu.matmul %46, %0, %cst_26 {dimension_numbers = #tpu.dot_dimension_numbers<[1], [0], [0], [1], [0, 0, 1, 1], [], []>} : vector<8x128xbf16>, vector<128x128xbf16>, vector<8x128xf32> -> vector<8x128xf32>
    %48 = vector.broadcast %2 : vector<1x128xf32> to vector<8x128xf32>
    %49 = arith.addf %47, %48 : vector<8x128xf32>
    %cst_27 = arith.constant 5.000000e-01 : f32
    %50 = vector.broadcast %cst_27 : f32 to vector<8x128xf32>
    %51 = arith.mulf %50, %49 : vector<8x128xf32>
    %cst_28 = arith.constant 4.471500e-02 : f32
    %52 = vector.broadcast %cst_28 : f32 to vector<8x128xf32>
    %53 = arith.mulf %52, %49 : vector<8x128xf32>
    %54 = arith.mulf %53, %49 : vector<8x128xf32>
    %55 = arith.mulf %54, %49 : vector<8x128xf32>
    %56 = arith.addf %49, %55 : vector<8x128xf32>
    %cst_29 = arith.constant 0.797884583 : f32
    %57 = vector.broadcast %cst_29 : f32 to vector<8x128xf32>
    %58 = arith.mulf %57, %56 : vector<8x128xf32>
    %59 = math.tanh %58 : vector<8x128xf32>
    %cst_30 = arith.constant 1.000000e+00 : f32
    %60 = vector.broadcast %cst_30 : f32 to vector<8x128xf32>
    %61 = arith.addf %60, %59 : vector<8x128xf32>
    %62 = arith.mulf %51, %61 : vector<8x128xf32>
    %63 = arith.addf %44, %62 : vector<8x128xf32>
    %64 = arith.truncf %63 : vector<8x128xf32> to vector<8x128xbf16>
    %cst_31 = arith.constant dense<0.000000e+00> : vector<8x128xf32>
    %65 = tpu.matmul %64, %1, %cst_31 {dimension_numbers = #tpu.dot_dimension_numbers<[1], [0], [0], [1], [0, 0, 1, 1], [], []>} : vector<8x128xbf16>, vector<128x128xbf16>, vector<8x128xf32> -> vector<8x128xf32>
    %66 = vector.broadcast %3 : vector<1x128xf32> to vector<8x128xf32>
    %67 = arith.addf %65, %66 : vector<8x128xf32>
    %cst_32 = arith.constant 5.000000e-01 : f32
    %68 = vector.broadcast %cst_32 : f32 to vector<8x128xf32>
    %69 = arith.mulf %68, %67 : vector<8x128xf32>
    %cst_33 = arith.constant 4.471500e-02 : f32
    %70 = vector.broadcast %cst_33 : f32 to vector<8x128xf32>
    %71 = arith.mulf %70, %67 : vector<8x128xf32>
    %72 = arith.mulf %71, %67 : vector<8x128xf32>
    %73 = arith.mulf %72, %67 : vector<8x128xf32>
    %74 = arith.addf %67, %73 : vector<8x128xf32>
    %cst_34 = arith.constant 0.797884583 : f32
    %75 = vector.broadcast %cst_34 : f32 to vector<8x128xf32>
    %76 = arith.mulf %75, %74 : vector<8x128xf32>
    %77 = math.tanh %76 : vector<8x128xf32>
    %cst_35 = arith.constant 1.000000e+00 : f32
    %78 = vector.broadcast %cst_35 : f32 to vector<8x128xf32>
    %79 = arith.addf %78, %77 : vector<8x128xf32>
    %80 = arith.mulf %69, %79 : vector<8x128xf32>
    %81 = arith.addf %45, %80 : vector<8x128xf32>
    %c8_36 = arith.constant 8 : index
    %c0_37 = arith.constant 0 : index
    %82 = vector.load %arg6[%c8_36, %c0_37] : memref<16x256xf32, #tpu.memory_space<vmem>>, vector<8x128xf32>
    tpu.vector_store %arg6[%c8_36, %c0_37], %63 {strides = array<i32>} : memref<16x256xf32, #tpu.memory_space<vmem>>, vector<8x128xf32>,
    %c8_38 = arith.constant 8 : index
    %c128_39 = arith.constant 128 : index
    %83 = vector.load %arg6[%c8_38, %c128_39] : memref<16x256xf32, #tpu.memory_space<vmem>>, vector<8x128xf32>
    tpu.vector_store %arg6[%c8_38, %c128_39], %81 {strides = array<i32>} : memref<16x256xf32, #tpu.memory_space<vmem>>, vector<8x128xf32>,
    return
  }
  func.func @transform_0(%arg0: i32) -> (i32, i32) {
    %c0_i32 = arith.constant 0 : i32
    %c0_i32_0 = arith.constant 0 : i32
    return %arg0, %c0_i32 : i32, i32
  }
  func.func @transform_1(%arg0: i32) -> (i32, i32) {
    %c0_i32 = arith.constant 0 : i32
    %c0_i32_0 = arith.constant 0 : i32
    %c0_i32_1 = arith.constant 0 : i32
    return %c0_i32, %c0_i32_0 : i32, i32
  }
  func.func @transform_2(%arg0: i32) -> (i32, i32) {
    %c0_i32 = arith.constant 0 : i32
    %c0_i32_0 = arith.constant 0 : i32
    %c0_i32_1 = arith.constant 0 : i32
    return %c0_i32, %c0_i32_0 : i32, i32
  }
  func.func @transform_3(%arg0: i32) -> (i32, i32) {
    %c0_i32 = arith.constant 0 : i32
    %c0_i32_0 = arith.constant 0 : i32
    %c0_i32_1 = arith.constant 0 : i32
    return %c0_i32, %c0_i32_0 : i32, i32
  }
  func.func @transform_4(%arg0: i32) -> (i32, i32) {
    %c0_i32 = arith.constant 0 : i32
    %c0_i32_0 = arith.constant 0 : i32
    %c0_i32_1 = arith.constant 0 : i32
    return %c0_i32, %c0_i32_0 : i32, i32
  }
  func.func @transform_5(%arg0: i32) -> (i32, i32) {
    %c0_i32 = arith.constant 0 : i32
    %c0_i32_0 = arith.constant 0 : i32
    return %arg0, %c0_i32 : i32, i32
  }
}

</mosaic_0001>

<llo_original>
// kernel: tpu_custom_call.1
$region0: #{tpu_custom_call.1}
  #allocation0 [shape = 'u32[]', space=smem, size = 0x4, offset = 0x4, fixed_abs, tag = 'smem constant byte address 0x4 - core index']
  #allocation1 [shape = 'u32[144,128]{1,0:T(1,128)}', space=vmem, size = 0x12000, scoped, tag = 'internal scratch']
  %s0 = inlined_call_operand.hbm [shape: f32[16,256], index: 0, kind: input, shape index: {}]
  %s1 = inlined_call_operand.hbm [shape: bf16[128,128], index: 1, kind: input, shape index: {}]
  %s2 = inlined_call_operand.vmem [shape: f32[1,128], index: 2, kind: input, shape index: {}]
  %s3 = inlined_call_operand.hbm [shape: bf16[128,128], index: 3, kind: input, shape index: {}]
  %s4 = inlined_call_operand.vmem [shape: f32[1,128], index: 4, kind: input, shape index: {}]
  %s5 = inlined_call_operand.hbm [shape: f32[16,256], index: 5, kind: output, shape index: {}]
  %s6 = sld [smem:[#allocation0]]
  $region42: #{tpu_custom_call.1} parent=0
    _
  %s8 = ssub.s32 1, %s6
  %s9 = scalar_select 0, %s8, %s6
  $region1: #{tpu_custom_call.1} parent=0
    #allocation2 [shape = 'u8[16384]{0}', space=vmem, size = 0x4000, scoped, tag = 'input window, operand 0, single buffered']
    #allocation3 [shape = 's32[1]{0}', space=sflag, size = 0x4, scoped, tag = 'scoped memory for tpu_custom_call.1']
    #allocation4 [shape = 's32[1]{0}', space=sflag, size = 0x4, scoped, tag = 'scoped memory for tpu_custom_call.1']
    #allocation5 [shape = 'u8[32768]{0}', space=vmem, size = 0x8000, scoped, tag = 'input window, operand 1, single buffered']
    #allocation6 [shape = 's32[1]{0}', space=sflag, size = 0x4, scoped, tag = 'scoped memory for tpu_custom_call.1']
    #allocation7 [shape = 'u8[32768]{0}', space=vmem, size = 0x8000, scoped, tag = 'input window, operand 3, single buffered']
    #allocation8 [shape = 'u8[16384]{0}', space=vmem, size = 0x4000, scoped, tag = 'output window, operand 0, single buffered']
    %10 = vsyncpa [#allocation3], 0
    %11 = vsyncpa [#allocation6], 0
    %12 = vsyncpa [#allocation4], 0
    // Predicated region
    $region2: #{tpu_custom_call.1} parent=1 // pred_check
      _
    $region3: #{tpu_custom_call.1} parent=1 // pred_check_branch
      %14 = sbr.rel (0) target = $region5
    $region4: #{tpu_custom_call.1} parent=1 // pred_region
      %s16 = ssub.s32 512, 512
      %17 = vsyncadd [#allocation3], %s16
      %s18 = sshll.u32 [#allocation2], 4
      %s19 = int_to_ptr.vmem [resolvable:$true] %s18
      %24 = dma.hbm_to_vmem [thread:$0]  %s0, 512, %s19, [#allocation3], 256, 256, 16
    $region5: #{tpu_custom_call.1} parent=1 // pred_fallthru
      _
    // Predicated region
    $region6: #{tpu_custom_call.1} parent=1 // pred_check
      _
    $region7: #{tpu_custom_call.1} parent=1 // pred_check_branch
      %26 = sbr.rel (0) target = $region9
    $region8: #{tpu_custom_call.1} parent=1 // pred_region
      %s28 = ssub.s32 1024, 1024
      %29 = vsyncadd [#allocation6], %s28
      %s30 = sshll.u32 [#allocation5], 4
      %s31 = int_to_ptr.vmem [resolvable:$true] %s30
      %36 = dma.hbm_to_vmem [thread:$0]  %s1, 1024, %s31, [#allocation6], 64, 64, 4
    $region9: #{tpu_custom_call.1} parent=1 // pred_fallthru
      _
    // Predicated region
    $region10: #{tpu_custom_call.1} parent=1 // pred_check
      _
    $region11: #{tpu_custom_call.1} parent=1 // pred_check_branch
      %38 = sbr.rel (0) target = $region13
    $region12: #{tpu_custom_call.1} parent=1 // pred_region
      _
    $region13: #{tpu_custom_call.1} parent=1 // pred_fallthru
      _
    // Predicated region
    $region14: #{tpu_custom_call.1} parent=1 // pred_check
      _
    $region15: #{tpu_custom_call.1} parent=1 // pred_check_branch
      %40 = sbr.rel (0) target = $region17
    $region16: #{tpu_custom_call.1} parent=1 // pred_region
      %s42 = ssub.s32 1024, 1024
      %43 = vsyncadd [#allocation6], %s42
      %s44 = sshll.u32 [#allocation7], 4
      %s45 = int_to_ptr.vmem [resolvable:$true] %s44
      %50 = dma.hbm_to_vmem [thread:$0]  %s3, 1024, %s45, [#allocation6], 64, 64, 4
    $region17: #{tpu_custom_call.1} parent=1 // pred_fallthru
      _
    // Predicated region
    $region18: #{tpu_custom_call.1} parent=1 // pred_check
      _
    $region19: #{tpu_custom_call.1} parent=1 // pred_check_branch
      %52 = sbr.rel (0) target = $region21
    $region20: #{tpu_custom_call.1} parent=1 // pred_region
      _
    $region21: #{tpu_custom_call.1} parent=1 // pred_fallthru
      _
    // Predicated region
    $region22: #{tpu_custom_call.1} parent=1 // pred_check
      _
    $region23: #{tpu_custom_call.1} parent=1 // pred_check_branch
      %54 = sbr.rel (0) target = $region25
    $region24: #{tpu_custom_call.1} parent=1 // pred_region
      %55 = dma.done [#allocation3], 512
    $region25: #{tpu_custom_call.1} parent=1 // pred_fallthru
      _
    // Predicated region
    $region26: #{tpu_custom_call.1} parent=1 // pred_check
      _
    $region27: #{tpu_custom_call.1} parent=1 // pred_check_branch
      %57 = sbr.rel (0) target = $region29
    $region28: #{tpu_custom_call.1} parent=1 // pred_region
      %58 = dma.done [#allocation6], 1024
    $region29: #{tpu_custom_call.1} parent=1 // pred_fallthru
      _
    // Predicated region
    $region30: #{tpu_custom_call.1} parent=1 // pred_check
      _
    $region31: #{tpu_custom_call.1} parent=1 // pred_check_branch
      %60 = sbr.rel (0) target = $region33
    $region32: #{tpu_custom_call.1} parent=1 // pred_region
      %61 = dma.done [#allocation6], 1024
    $region33: #{tpu_custom_call.1} parent=1 // pred_fallthru
      _
    %v63 = vld [vmem:[#allocation5] sm:$0xf]
    %v64 = vld [vmem:[#allocation5 + $0x4] sm:$0xf]
    %v65 = vld [vmem:[#allocation5 + $0x8] sm:$0xf]
    %v66 = vld [vmem:[#allocation5 + $0xc] sm:$0xf]
    %v67 = vld [vmem:[#allocation5 + $0x10] sm:$0xf]
    %v68 = vld [vmem:[#allocation5 + $0x14] sm:$0xf]
    %v69 = vld [vmem:[#allocation5 + $0x18] sm:$0xf]
    %v70 = vld [vmem:[#allocation5 + $0x1c] sm:$0xf]
    %v71 = vld [vmem:[#allocation5 + $0x20] sm:$0xf]
    %v72 = vld [vmem:[#allocation5 + $0x24] sm:$0xf]
    %v73 = vld [vmem:[#allocation5 + $0x28] sm:$0xf]
    %v74 = vld [vmem:[#allocation5 + $0x2c] sm:$0xf]
    %v75 = vld [vmem:[#allocation5 + $0x30] sm:$0xf]
    %v76 = vld [vmem:[#allocation5 + $0x34] sm:$0xf]
    %v77 = vld [vmem:[#allocation5 + $0x38] sm:$0xf]
    %v78 = vld [vmem:[#allocation5 + $0x3c] sm:$0xf]
    %v79 = vld [vmem:[#allocation7] sm:$0xf]
    %v80 = vld [vmem:[#allocation7 + $0x4] sm:$0xf]
    %v81 = vld [vmem:[#allocation7 + $0x8] sm:$0xf]
    %v82 = vld [vmem:[#allocation7 + $0xc] sm:$0xf]
    %v83 = vld [vmem:[#allocation7 + $0x10] sm:$0xf]
    %v84 = vld [vmem:[#allocation7 + $0x14] sm:$0xf]
    %v85 = vld [vmem:[#allocation7 + $0x18] sm:$0xf]
    %v86 = vld [vmem:[#allocation7 + $0x1c] sm:$0xf]
    %v87 = vld [vmem:[#allocation7 + $0x20] sm:$0xf]
    %v88 = vld [vmem:[#allocation7 + $0x24] sm:$0xf]
    %v89 = vld [vmem:[#allocation7 + $0x28] sm:$0xf]
    %v90 = vld [vmem:[#allocation7 + $0x2c] sm:$0xf]
    %v91 = vld [vmem:[#allocation7 + $0x30] sm:$0xf]
    %v92 = vld [vmem:[#allocation7 + $0x34] sm:$0xf]
    %v93 = vld [vmem:[#allocation7 + $0x38] sm:$0xf]
    %v94 = vld [vmem:[#allocation7 + $0x3c] sm:$0xf]
    %v95 = vld [vmem:[%s2] sm:$0x1]
    %v96 = vld [vmem:[%s4] sm:$0x1]
    %v97 = vld [vmem:[#allocation2] sm:$0xff]
    %v98 = vld [vmem:[#allocation2 + $0x8] sm:$0xff]
    %v99 = vpack.c.bf16 %v98, %v98
    %v101 = vlaneseq
    %v102 = vshrl.u32 %v101, 7
    %v103 = vsub.s32 0, %v102
    %v104 = vrot.slane %v95, %v103
    %v122 = vunpack.c.l.b16 %v63
    %v123 = vunpack.c.l.b16 %v64
    %v124 = vunpack.c.l.b16 %v65
    %v125 = vunpack.c.l.b16 %v66
    %v126 = vunpack.c.l.b16 %v67
    %v127 = vunpack.c.l.b16 %v68
    %v128 = vunpack.c.l.b16 %v69
    %v129 = vunpack.c.l.b16 %v70
    %v130 = vunpack.c.l.b16 %v71
    %v131 = vunpack.c.l.b16 %v72
    %v132 = vunpack.c.l.b16 %v73
    %v133 = vunpack.c.l.b16 %v74
    %v134 = vunpack.c.l.b16 %v75
    %v135 = vunpack.c.l.b16 %v76
    %v136 = vunpack.c.l.b16 %v77
    %v137 = vunpack.c.l.b16 %v78
    %v138 = vpack.c.b16 %v123, %v122
    %v139 = vpack.c.b16 %v125, %v124
    %v140 = vpack.c.b16 %v127, %v126
    %v141 = vpack.c.b16 %v129, %v128
    %v142 = vpack.c.b16 %v131, %v130
    %v143 = vpack.c.b16 %v133, %v132
    %v144 = vpack.c.b16 %v135, %v134
    %v145 = vpack.c.b16 %v137, %v136
    %154 = vmatprep.subr.bf16.mxu0 0
    %155 = vmatpush1.bf16.msra.mxu0 %v138
    %156 = vmatprep.subr.bf16.mxu0 0
    %157 = vmatpush1.bf16.msra.mxu0 %v139
    %158 = vmatprep.subr.bf16.mxu0 0
    %159 = vmatpush1.bf16.msra.mxu0 %v140
    %160 = vmatprep.subr.bf16.mxu0 0
    %161 = vmatpush1.bf16.msra.mxu0 %v141
    %162 = vmatprep.subr.bf16.mxu0 0
    %163 = vmatpush1.bf16.msra.mxu0 %v142
    %164 = vmatprep.subr.bf16.mxu0 0
    %165 = vmatpush1.bf16.msra.mxu0 %v143
    %166 = vmatprep.subr.bf16.mxu0 0
    %167 = vmatpush1.bf16.msra.mxu0 %v144
    %168 = vmatprep.subr.bf16.mxu0 0
    %169 = vmatpush1.bf16.msra.mxu0 %v145
    %170 = vmatprep.subr.bf16.mxu0 0
    %171 = vmatpush1.bf16.msra.mxu0 0
    %172 = vmatprep.subr.bf16.mxu0 0
    %173 = vmatpush1.bf16.msra.mxu0 0
    %174 = vmatprep.subr.bf16.mxu0 0
    %175 = vmatpush1.bf16.msra.mxu0 0
    %176 = vmatprep.subr.bf16.mxu0 0
    %177 = vmatpush1.bf16.msra.mxu0 0
    %178 = vmatprep.subr.bf16.mxu0 0
    %179 = vmatpush1.bf16.msra.mxu0 0
    %180 = vmatprep.subr.bf16.mxu0 0
    %181 = vmatpush1.bf16.msra.mxu0 0
    %182 = vmatprep.subr.bf16.mxu0 0
    %183 = vmatpush1.bf16.msra.mxu0 0
    %184 = vmatprep.subr.bf16.mxu0 0
    %185 = vmatpush1.bf16.msra.mxu0 0
    %186 = vmatprep.mubr.bf16.mxu0 0
    %187 = vmatmul.mubr.bf16.gmra.mrb[0].mxu0 %v99
    %v188 = vpop.f32.mrb[0].mxu0
    %v189 = vadd.f32 %v104, %v188
    %v190 = vpop.f32.mrb[0].mxu0
    %v191 = vpop.f32.mrb[0].mxu0
    %v192 = vpop.f32.mrb[0].mxu0
    %193 = vdwg.mxu0
    %v194 = vmul.f32 %v189, 0.5
    %v195 = vmul.f32 %v189, 0.044715
    %v196 = vmul.f32 %v195, %v189
    %v197 = vmul.f32 %v196, %v189
    %v198 = vadd.f32 %v189, %v197
    %v199 = vmul.f32 %v198, 0.7978846
    %v200 = vtanh.pop %v199
    %v201 = vadd.f32 %v200, 1.0
    %v202 = vmul.f32 %v194, %v201
    %v203 = vadd.f32 %v97, %v202
    %v204 = vpack.c.bf16 %v203, %v203
    %v206 = vlaneseq
    %v207 = vshrl.u32 %v206, 7
    %v208 = vsub.s32 0, %v207
    %v209 = vrot.slane %v96, %v208
    %v227 = vunpack.c.l.b16 %v79
    %v228 = vunpack.c.l.b16 %v80
    %v229 = vunpack.c.l.b16 %v81
    %v230 = vunpack.c.l.b16 %v82
    %v231 = vunpack.c.l.b16 %v83
    %v232 = vunpack.c.l.b16 %v84
    %v233 = vunpack.c.l.b16 %v85
    %v234 = vunpack.c.l.b16 %v86
    %v235 = vunpack.c.l.b16 %v87
    %v236 = vunpack.c.l.b16 %v88
    %v237 = vunpack.c.l.b16 %v89
    %v238 = vunpack.c.l.b16 %v90
    %v239 = vunpack.c.l.b16 %v91
    %v240 = vunpack.c.l.b16 %v92
    %v241 = vunpack.c.l.b16 %v93
    %v242 = vunpack.c.l.b16 %v94
    %v243 = vpack.c.b16 %v228, %v227
    %v244 = vpack.c.b16 %v230, %v229
    %v245 = vpack.c.b16 %v232, %v231
    %v246 = vpack.c.b16 %v234, %v233
    %v247 = vpack.c.b16 %v236, %v235
    %v248 = vpack.c.b16 %v238, %v237
    %v249 = vpack.c.b16 %v240, %v239
    %v250 = vpack.c.b16 %v242, %v241
    %259 = vmatprep.subr.bf16.mxu0 0
    %260 = vmatpush1.bf16.msra.mxu0 %v243
    %261 = vmatprep.subr.bf16.mxu0 0
    %262 = vmatpush1.bf16.msra.mxu0 %v244
    %263 = vmatprep.subr.bf16.mxu0 0
    %264 = vmatpush1.bf16.msra.mxu0 %v245
    %265 = vmatprep.subr.bf16.mxu0 0
    %266 = vmatpush1.bf16.msra.mxu0 %v246
    %267 = vmatprep.subr.bf16.mxu0 0
    %268 = vmatpush1.bf16.msra.mxu0 %v247
    %269 = vmatprep.subr.bf16.mxu0 0
    %270 = vmatpush1.bf16.msra.mxu0 %v248
    %271 = vmatprep.subr.bf16.mxu0 0
    %272 = vmatpush1.bf16.msra.mxu0 %v249
    %273 = vmatprep.subr.bf16.mxu0 0
    %274 = vmatpush1.bf16.msra.mxu0 %v250
    %275 = vmatprep.subr.bf16.mxu0 0
    %276 = vmatpush1.bf16.msra.mxu0 0
    %277 = vmatprep.subr.bf16.mxu0 0
    %278 = vmatpush1.bf16.msra.mxu0 0
    %279 = vmatprep.subr.bf16.mxu0 0
    %280 = vmatpush1.bf16.msra.mxu0 0
    %281 = vmatprep.subr.bf16.mxu0 0
    %282 = vmatpush1.bf16.msra.mxu0 0
    %283 = vmatprep.subr.bf16.mxu0 0
    %284 = vmatpush1.bf16.msra.mxu0 0
    %285 = vmatprep.subr.bf16.mxu0 0
    %286 = vmatpush1.bf16.msra.mxu0 0
    %287 = vmatprep.subr.bf16.mxu0 0
    %288 = vmatpush1.bf16.msra.mxu0 0
    %289 = vmatprep.subr.bf16.mxu0 0
    %290 = vmatpush1.bf16.msra.mxu0 0
    %291 = vmatprep.mubr.bf16.mxu0 0
    %292 = vmatmul.mubr.bf16.gmra.mrb[0].mxu0 %v204
    %v293 = vpop.f32.mrb[0].mxu0
    %v294 = vadd.f32 %v209, %v293
    %v295 = vpop.f32.mrb[0].mxu0
    %v296 = vpop.f32.mrb[0].mxu0
    %v297 = vpop.f32.mrb[0].mxu0
    %298 = vdwg.mxu0
    %v299 = vmul.f32 %v294, 0.5
    %v300 = vmul.f32 %v294, 0.044715
    %v301 = vmul.f32 %v300, %v294
    %v302 = vmul.f32 %v301, %v294
    %v303 = vadd.f32 %v294, %v302
    %v304 = vmul.f32 %v303, 0.7978846
    %v305 = vtanh.pop %v304
    %v306 = vadd.f32 %v305, 1.0
    %v307 = vmul.f32 %v299, %v306
    %v308 = vadd.f32 %v98, %v307
    %309 = vst [vmem:[#allocation8] sm:$0xff] %v203
    %310 = vst [vmem:[#allocation8 + $0x8] sm:$0xff] %v308
    %v311 = vld [vmem:[#allocation2 + $0x10] sm:$0xff]
    %v312 = vld [vmem:[#allocation2 + $0x18] sm:$0xff]
    %v313 = vpack.c.bf16 %v312, %v312
    %314 = vmatprep.subr.bf16.mxu0 0
    %315 = vmatpush1.bf16.msra.mxu0 %v138
    %316 = vmatprep.subr.bf16.mxu0 0
    %317 = vmatpush1.bf16.msra.mxu0 %v139
    %318 = vmatprep.subr.bf16.mxu0 0
    %319 = vmatpush1.bf16.msra.mxu0 %v140
    %320 = vmatprep.subr.bf16.mxu0 0
    %321 = vmatpush1.bf16.msra.mxu0 %v141
    %322 = vmatprep.subr.bf16.mxu0 0
    %323 = vmatpush1.bf16.msra.mxu0 %v142
    %324 = vmatprep.subr.bf16.mxu0 0
    %325 = vmatpush1.bf16.msra.mxu0 %v143
    %326 = vmatprep.subr.bf16.mxu0 0
    %327 = vmatpush1.bf16.msra.mxu0 %v144
    %328 = vmatprep.subr.bf16.mxu0 0
    %329 = vmatpush1.bf16.msra.mxu0 %v145
    %330 = vmatprep.subr.bf16.mxu0 0
    %331 = vmatpush1.bf16.msra.mxu0 0
    %332 = vmatprep.subr.bf16.mxu0 0
    %333 = vmatpush1.bf16.msra.mxu0 0
    %334 = vmatprep.subr.bf16.mxu0 0
    %335 = vmatpush1.bf16.msra.mxu0 0
    %336 = vmatprep.subr.bf16.mxu0 0
    %337 = vmatpush1.bf16.msra.mxu0 0
    %338 = vmatprep.subr.bf16.mxu0 0
    %339 = vmatpush1.bf16.msra.mxu0 0
    %340 = vmatprep.subr.bf16.mxu0 0
    %341 = vmatpush1.bf16.msra.mxu0 0
    %342 = vmatprep.subr.bf16.mxu0 0
    %343 = vmatpush1.bf16.msra.mxu0 0
    %344 = vmatprep.subr.bf16.mxu0 0
    %345 = vmatpush1.bf16.msra.mxu0 0
    %346 = vmatprep.mubr.bf16.mxu0 0
    %347 = vmatmul.mubr.bf16.gmra.mrb[0].mxu0 %v313
    %v348 = vpop.f32.mrb[0].mxu0
    %v349 = vadd.f32 %v104, %v348
    %v350 = vpop.f32.mrb[0].mxu0
    %v351 = vpop.f32.mrb[0].mxu0
    %v352 = vpop.f32.mrb[0].mxu0
    %353 = vdwg.mxu0
    %v354 = vmul.f32 %v349, 0.5
    %v355 = vmul.f32 %v349, 0.044715
    %v356 = vmul.f32 %v355, %v349
    %v357 = vmul.f32 %v356, %v349
    %v358 = vadd.f32 %v349, %v357
    %v359 = vmul.f32 %v358, 0.7978846
    %v360 = vtanh.pop %v359
    %v361 = vadd.f32 %v360, 1.0
    %v362 = vmul.f32 %v354, %v361
    %v363 = vadd.f32 %v311, %v362
    %v364 = vpack.c.bf16 %v363, %v363
    %365 = vmatprep.subr.bf16.mxu0 0
    %366 = vmatpush1.bf16.msra.mxu0 %v243
    %367 = vmatprep.subr.bf16.mxu0 0
    %368 = vmatpush1.bf16.msra.mxu0 %v244
    %369 = vmatprep.subr.bf16.mxu0 0
    %370 = vmatpush1.bf16.msra.mxu0 %v245
    %371 = vmatprep.subr.bf16.mxu0 0
    %372 = vmatpush1.bf16.msra.mxu0 %v246
    %373 = vmatprep.subr.bf16.mxu0 0
    %374 = vmatpush1.bf16.msra.mxu0 %v247
    %375 = vmatprep.subr.bf16.mxu0 0
    %376 = vmatpush1.bf16.msra.mxu0 %v248
    %377 = vmatprep.subr.bf16.mxu0 0
    %378 = vmatpush1.bf16.msra.mxu0 %v249
    %379 = vmatprep.subr.bf16.mxu0 0
    %380 = vmatpush1.bf16.msra.mxu0 %v250
    %381 = vmatprep.subr.bf16.mxu0 0
    %382 = vmatpush1.bf16.msra.mxu0 0
    %383 = vmatprep.subr.bf16.mxu0 0
    %384 = vmatpush1.bf16.msra.mxu0 0
    %385 = vmatprep.subr.bf16.mxu0 0
    %386 = vmatpush1.bf16.msra.mxu0 0
    %387 = vmatprep.subr.bf16.mxu0 0
    %388 = vmatpush1.bf16.msra.mxu0 0
    %389 = vmatprep.subr.bf16.mxu0 0
    %390 = vmatpush1.bf16.msra.mxu0 0
    %391 = vmatprep.subr.bf16.mxu0 0
    %392 = vmatpush1.bf16.msra.mxu0 0
    %393 = vmatprep.subr.bf16.mxu0 0
    %394 = vmatpush1.bf16.msra.mxu0 0
    %395 = vmatprep.subr.bf16.mxu0 0
    %396 = vmatpush1.bf16.msra.mxu0 0
    %397 = vmatprep.mubr.bf16.mxu0 0
    %398 = vmatmul.mubr.bf16.gmra.mrb[0].mxu0 %v364
    %v399 = vpop.f32.mrb[0].mxu0
    %v400 = vadd.f32 %v209, %v399
    %v401 = vpop.f32.mrb[0].mxu0
    %v402 = vpop.f32.mrb[0].mxu0
    %v403 = vpop.f32.mrb[0].mxu0
    %404 = vdwg.mxu0
    %v405 = vmul.f32 %v400, 0.5
    %v406 = vmul.f32 %v400, 0.044715
    %v407 = vmul.f32 %v406, %v400
    %v408 = vmul.f32 %v407, %v400
    %v409 = vadd.f32 %v400, %v408
    %v410 = vmul.f32 %v409, 0.7978846
    %v411 = vtanh.pop %v410
    %v412 = vadd.f32 %v411, 1.0
    %v413 = vmul.f32 %v405, %v412
    %v414 = vadd.f32 %v312, %v413
    %415 = vst [vmem:[#allocation8 + $0x10] sm:$0xff] %v363
    %416 = vst [vmem:[#allocation8 + $0x18] sm:$0xff] %v414
    // Predicated region
    $region34: #{tpu_custom_call.1} parent=1 // pred_check
      _
    $region35: #{tpu_custom_call.1} parent=1 // pred_check_branch
      %418 = sbr.rel (0) target = $region37
    $region36: #{tpu_custom_call.1} parent=1 // pred_region
      %s420 = ssub.s32 512, 512
      %421 = vsyncadd [#allocation4], %s420
      %s422 = sshll.u32 [#allocation8], 4
      %s423 = int_to_ptr.vmem [resolvable:$true] %s422
      %428 = dma.vmem_to_hbm [thread:$0]  %s423, 512, %s5, [#allocation4], 256, 256, 16
    $region37: #{tpu_custom_call.1} parent=1 // pred_fallthru
      _
    // Predicated region
    $region38: #{tpu_custom_call.1} parent=1 // pred_check
      _
    $region39: #{tpu_custom_call.1} parent=1 // pred_check_branch
      %430 = sbr.rel (0) target = $region41
    $region40: #{tpu_custom_call.1} parent=1 // pred_region
      %431 = dma.done [#allocation4], 512
    $region41: #{tpu_custom_call.1} parent=1 // pred_fallthru
      _
    %432 = vsyncpa [#allocation3], 1
    %433 = vsyncpa [#allocation6], 1
    %434 = vsyncpa [#allocation4], 1

</llo_original>
